<compile_context>
chip_gen: v6e
topology: v6e:2x2x1
jax: 0.10.0
libtpu: 0.0.40
codegen_flags: <defaults>
</compile_context>

<pallas_src>
import functools

import jax
import jax.numpy as jnp
from jax.experimental import pallas as pl
from jax.experimental.pallas import tpu as pltpu


def _round_up(n, m):
    return ((n + m - 1) // m) * m


def _choose_block_b(batch, block_b):
    """Batch tile: multiple of 8, <= block_b, and >=2 grid steps when B >= 16
    so the 'parallel' batch axis can be sharded across v7x's two TensorCores."""
    b8 = _round_up(max(batch, 1), 8)
    if b8 >= 16:
        half = _round_up(pl.cdiv(b8, 2), 8)
    else:
        half = b8
    return max(8, min(block_b, half))


def _default_tanh_dtype():
    """bf16 bias+tanh on v6e/v7x (bf16 VPU/EUP); f32 on v5e/v4 (no bf16 VPU/EUP)."""
    try:
        kind = jax.devices()[0].device_kind.lower()
    except Exception:  # pragma: no cover - be conservative if query fails
        return jnp.float32
    if "v2" in kind or "v3" in kind or "v4" in kind or "v5" in kind:
        return jnp.float32
    return jnp.bfloat16


def _dqn_kernel(x_ref, w1_ref, b1_ref, w2_ref, b2_ref, out_ref, *, tanh_dtype):
    # In-kernel bf16 cast of the f32 input tile (no padded HBM copy of x).
    xb = x_ref[...].astype(w1_ref.dtype)                       # (tb, obs) bf16
    # fc1: (tb, obs) @ (obs, 128) with f32 accumulation on the MXU.
    h = jnp.dot(xb, w1_ref[...], preferred_element_type=jnp.float32)
    # Bias + tanh: f32 on v5e, bf16 on v6e/v7x (halves EUP work, drops a cast).
    h = jnp.tanh((h + b1_ref[...]).astype(tanh_dtype))
    # fc2: (tb, 128) @ (128, act_p) with f32 accumulation.
    out = jnp.dot(h.astype(w2_ref.dtype), w2_ref[...],
                  preferred_element_type=jnp.float32)
    out_ref[...] = (out + b2_ref[...]).astype(out_ref.dtype)


def prepare_dqn_params(w1, b1, w2, b2, *, compute_dtype=jnp.bfloat16):
    """One-time parameter prep (call at init / after each optimizer step).

    Pads the action dim to 8 (cheap lane-masked stores; 16x less writeback than
    a 128-wide f32 slab) and casts the weights to bf16.  Biases stay f32.
    """
    obs, hidden = w1.shape
    act = w2.shape[1]
    act_p = max(_round_up(act, 8), 8)

    w1c = jnp.asarray(w1).astype(compute_dtype)                           # (obs, hidden)
    b1c = jnp.asarray(b1, jnp.float32).reshape(1, hidden)                 # (1, hidden) f32
    w2p = jnp.zeros((hidden, act_p), compute_dtype).at[:, :act].set(
        jnp.asarray(w2).astype(compute_dtype))                            # (hidden, act_p)
    b2p = jnp.zeros((1, act_p), jnp.float32).at[:, :act].set(
        jnp.asarray(b2, jnp.float32).reshape(1, act))                     # (1, act_p) f32
    return {"w1": w1c, "b1": b1c, "w2": w2p, "b2": b2p, "act": act}


def dqn_forward(x, params, *, block_b=1024, tanh_dtype=None, return_padded=False):
    """x: (B, obs) f32; params from prepare_dqn_params.  Returns (B, act) f32
    Q-values (or the (B, act_p) padded slab if return_padded=True; padded
    columns are exactly 0, so slice/mask before any argmax)."""
    x = jnp.asarray(x, jnp.float32)
    B, obs = x.shape
    w1, b1, w2, b2 = params["w1"], params["b1"], params["w2"], params["b2"]
    act = params["act"]
    hidden = w1.shape[1]
    act_p = w2.shape[1]
    assert w1.shape[0] == obs, "observation dim mismatch with prepared params"

    tb = _choose_block_b(B, block_b)
    grid = (pl.cdiv(B, tb),)
    if tanh_dtype is None:
        tanh_dtype = _default_tanh_dtype()

    cost = pl.CostEstimate(
        flops=2 * B * (obs * hidden + hidden * act_p),
        transcendentals=B * hidden,
        bytes_accessed=(B * obs * 4                       # x (f32, unpadded)
                        + w1.size * w1.dtype.itemsize
                        + w2.size * w2.dtype.itemsize
                        + b1.size * 4 + b2.size * 4
                        + B * act_p * 4),                 # output slab
    )

    vmem = pltpu.MemorySpace.VMEM
    out = pl.pallas_call(
        functools.partial(_dqn_kernel, tanh_dtype=tanh_dtype),
        out_shape=jax.ShapeDtypeStruct((B, act_p), jnp.float32),
        grid=grid,
        in_specs=[
            pl.BlockSpec((tb, obs), lambda i: (i, 0), memory_space=vmem),       # x tile (f32)
            pl.BlockSpec((obs, hidden), lambda i: (0, 0), memory_space=vmem),   # W1 resident
            pl.BlockSpec((1, hidden), lambda i: (0, 0), memory_space=vmem),     # b1 resident
            pl.BlockSpec((hidden, act_p), lambda i: (0, 0), memory_space=vmem), # W2 resident
            pl.BlockSpec((1, act_p), lambda i: (0, 0), memory_space=vmem),      # b2 resident
        ],
        out_specs=pl.BlockSpec((tb, act_p), lambda i: (i, 0), memory_space=vmem),
        compiler_params=pltpu.CompilerParams(
            dimension_semantics=("parallel",),
            vmem_limit_bytes=8 * 1024 * 1024,   # actual need ~2 MiB; leave headroom only
        ),
        cost_estimate=cost,
    )(x, w1, b1, w2, b2)

    if return_padded:
        return out
    return out[:, :act]


def init_dqn_params(key, observation_space, action_space, hidden=128):
    """Deterministic init mimicking PyTorch nn.Linear (uniform +-1/sqrt(fan_in))."""
    k1, k2, k3, k4 = jax.random.split(key, 4)
    lim1 = 1.0 / jnp.sqrt(jnp.float32(observation_space))
    lim2 = 1.0 / jnp.sqrt(jnp.float32(hidden))
    w1 = jax.random.uniform(k1, (observation_space, hidden), jnp.float32, -lim1, lim1)
    b1 = jax.random.uniform(k2, (1, hidden), jnp.float32, -lim1, lim1)
    w2 = jax.random.uniform(k3, (hidden, action_space), jnp.float32, -lim2, lim2)
    b2 = jax.random.uniform(k4, (1, action_space), jnp.float32, -lim2, lim2)
    return w1, b1, w2, b2


if __name__ == "__main__":
    observation_space = 4   # e.g. CartPole obs dim
    action_space = 2
    batch = 2

    key = jax.random.PRNGKey(0)
    kx, kp = jax.random.split(key)
    x = jax.random.normal(kx, (batch, observation_space), jnp.float32)
    w1, b1, w2, b2 = init_dqn_params(kp, observation_space, action_space)

    # One-time parameter prep (hoisted out of the per-call wrapper).
    params = prepare_dqn_params(w1, b1, w2, b2)

    # Small (action-selection-style) call: single 8-row tile, grid=(1,).
    out = jax.block_until_ready(dqn_forward(x, params))
    ref = jnp.tanh(x @ w1 + b1) @ w2 + b2
    assert out.shape == (batch, action_space)
    # bf16 operands (and bf16 tanh on v6e/v7x) with f32 accumulation => relaxed tolerance.
    assert jnp.allclose(out, ref, atol=3e-2, rtol=3e-2), float(jnp.max(jnp.abs(out - ref)))

    # Larger (training-minibatch-style) call: B=300 -> tb=152, grid=(2,) parallel
    # tiles (both v7x TCs busy), uneven last tile, no padded copy of x.
    xb = jax.random.normal(kx, (300, observation_space), jnp.float32)
    outb = jax.block_until_ready(dqn_forward(xb, params))
    refb = jnp.tanh(xb @ w1 + b1) @ w2 + b2
    assert outb.shape == (300, action_space)
    assert jnp.allclose(outb, refb, atol=3e-2, rtol=3e-2), float(jnp.max(jnp.abs(outb - refb)))

    print("KERNEL_OK")
</pallas_src>

<mosaic_0001>
module attributes {stable_mosaic.version = 11 : i64} {
  func.func @_dqn_kernel(%arg0: i32, %arg1: memref<8x4xf32, #tpu.memory_space<vmem>>, %arg2: memref<4x128xbf16, #tpu.memory_space<vmem>>, %arg3: memref<1x128xf32, #tpu.memory_space<vmem>>, %arg4: memref<128x8xbf16, #tpu.memory_space<vmem>>, %arg5: memref<1x8xf32, #tpu.memory_space<vmem>>, %arg6: memref<8x8xf32, #tpu.memory_space<vmem>>) attributes {dimension_semantics = [#tpu.dimension_semantics<parallel>], iteration_bounds = array<i64: 1>, scalar_prefetch = 0 : i64, scratch_operands = 0 : i64, tpu.core_type = #tpu.core_type<tc>, window_params = [{transform_indices = @transform_0, window_bounds = array<i64: 8, 4>}, {pipeline_mode = #tpu.pipeline_mode<synchronous>, transform_indices = @transform_1, window_bounds = array<i64: 4, 128>}, {pipeline_mode = #tpu.pipeline_mode<synchronous>, transform_indices = @transform_2, window_bounds = array<i64: 1, 128>}, {pipeline_mode = #tpu.pipeline_mode<synchronous>, transform_indices = @transform_3, window_bounds = array<i64: 128, 8>}, {pipeline_mode = #tpu.pipeline_mode<synchronous>, transform_indices = @transform_4, window_bounds = array<i64: 1, 8>}, {transform_indices = @transform_5, window_bounds = array<i64: 8, 8>}]} {
    %c0 = arith.constant 0 : index
    %c0_0 = arith.constant 0 : index
    %0 = vector.load %arg1[%c0, %c0_0] : memref<8x4xf32, #tpu.memory_space<vmem>>, vector<8x4xf32>
    %1 = arith.truncf %0 : vector<8x4xf32> to vector<8x4xbf16>
    %c0_1 = arith.constant 0 : index
    %c0_2 = arith.constant 0 : index
    %2 = vector.load %arg2[%c0_1, %c0_2] : memref<4x128xbf16, #tpu.memory_space<vmem>>, vector<4x128xbf16>
    %cst = arith.constant dense<0.000000e+00> : vector<8x128xf32>
    %3 = tpu.matmul %1, %2, %cst {dimension_numbers = #tpu.dot_dimension_numbers<[1], [0], [0], [1], [0, 0, 1, 1], [], []>} : vector<8x4xbf16>, vector<4x128xbf16>, vector<8x128xf32> -> vector<8x128xf32>
    %c0_3 = arith.constant 0 : index
    %c0_4 = arith.constant 0 : index
    %4 = vector.load %arg3[%c0_3, %c0_4] : memref<1x128xf32, #tpu.memory_space<vmem>>, vector<1x128xf32>
    %5 = vector.broadcast %4 : vector<1x128xf32> to vector<8x128xf32>
    %6 = arith.addf %3, %5 : vector<8x128xf32>
    %7 = arith.truncf %6 : vector<8x128xf32> to vector<8x128xbf16>
    %8 = math.tanh %7 : vector<8x128xbf16>
    %c0_5 = arith.constant 0 : index
    %c0_6 = arith.constant 0 : index
    %9 = vector.load %arg4[%c0_5, %c0_6] : memref<128x8xbf16, #tpu.memory_space<vmem>>, vector<128x8xbf16>
    %cst_7 = arith.constant dense<0.000000e+00> : vector<8x8xf32>
    %10 = tpu.matmul %8, %9, %cst_7 {dimension_numbers = #tpu.dot_dimension_numbers<[1], [0], [0], [1], [0, 0, 1, 1], [], []>} : vector<8x128xbf16>, vector<128x8xbf16>, vector<8x8xf32> -> vector<8x8xf32>
    %c0_8 = arith.constant 0 : index
    %c0_9 = arith.constant 0 : index
    %11 = vector.load %arg5[%c0_8, %c0_9] : memref<1x8xf32, #tpu.memory_space<vmem>>, vector<1x8xf32>
    %12 = vector.broadcast %11 : vector<1x8xf32> to vector<8x8xf32>
    %13 = arith.addf %10, %12 : vector<8x8xf32>
    %c0_10 = arith.constant 0 : index
    %c0_11 = arith.constant 0 : index
    %14 = vector.load %arg6[%c0_10, %c0_11] : memref<8x8xf32, #tpu.memory_space<vmem>>, vector<8x8xf32>
    tpu.vector_store %arg6[%c0_10, %c0_11], %13 {strides = array<i32>} : memref<8x8xf32, #tpu.memory_space<vmem>>, vector<8x8xf32>,
    return
  }
  func.func @transform_0(%arg0: i32) -> (i32, i32) {
    %c0_i32 = arith.constant 0 : i32
    %c0_i32_0 = arith.constant 0 : i32
    return %arg0, %c0_i32 : i32, i32
  }
  func.func @transform_1(%arg0: i32) -> (i32, i32) {
    %c0_i32 = arith.constant 0 : i32
    %c0_i32_0 = arith.constant 0 : i32
    %c0_i32_1 = arith.constant 0 : i32
    return %c0_i32, %c0_i32_0 : i32, i32
  }
  func.func @transform_2(%arg0: i32) -> (i32, i32) {
    %c0_i32 = arith.constant 0 : i32
    %c0_i32_0 = arith.constant 0 : i32
    %c0_i32_1 = arith.constant 0 : i32
    return %c0_i32, %c0_i32_0 : i32, i32
  }
  func.func @transform_3(%arg0: i32) -> (i32, i32) {
    %c0_i32 = arith.constant 0 : i32
    %c0_i32_0 = arith.constant 0 : i32
    %c0_i32_1 = arith.constant 0 : i32
    return %c0_i32, %c0_i32_0 : i32, i32
  }
  func.func @transform_4(%arg0: i32) -> (i32, i32) {
    %c0_i32 = arith.constant 0 : i32
    %c0_i32_0 = arith.constant 0 : i32
    %c0_i32_1 = arith.constant 0 : i32
    return %c0_i32, %c0_i32_0 : i32, i32
  }
  func.func @transform_5(%arg0: i32) -> (i32, i32) {
    %c0_i32 = arith.constant 0 : i32
    %c0_i32_0 = arith.constant 0 : i32
    return %arg0, %c0_i32 : i32, i32
  }
}

</mosaic_0001>

<llo_original>
// kernel: tpu_custom_call.1
$region0: #{tpu_custom_call.1}
  #allocation0 [shape = 'u32[]', space=smem, size = 0x4, offset = 0x4, fixed_abs, tag = 'smem constant byte address 0x4 - core index']
  #allocation1 [shape = 'u32[144,128]{1,0:T(1,128)}', space=vmem, size = 0x12000, scoped, tag = 'internal scratch']
  %s0 = inlined_call_operand.vmem [shape: f32[2,4], index: 0, kind: input, shape index: {}]
  %s1 = inlined_call_operand.vmem [shape: bf16[4,128], index: 1, kind: input, shape index: {}]
  %s2 = inlined_call_operand.vmem [shape: f32[1,128], index: 2, kind: input, shape index: {}]
  %s3 = inlined_call_operand.vmem [shape: bf16[128,8], index: 3, kind: input, shape index: {}]
  %s4 = inlined_call_operand.vmem [shape: f32[1,8], index: 4, kind: input, shape index: {}]
  %s5 = inlined_call_operand.hbm [shape: f32[2,8], index: 5, kind: output, shape index: {}]
  %s6 = sld [smem:[#allocation0]]
  $region30: #{tpu_custom_call.1} parent=0
    _
  %s8 = ssub.s32 1, %s6
  %s9 = scalar_select 0, %s8, %s6
  $region1: #{tpu_custom_call.1} parent=0
    #allocation2 [shape = 'u8[4096]{0}', space=vmem, size = 0x1000, scoped, tag = 'output window, operand 0, single buffered']
    #allocation3 [shape = 's32[1]{0}', space=sflag, size = 0x4, scoped, tag = 'scoped memory for tpu_custom_call.1']
    %10 = vsyncpa [#allocation3], 0
    // Predicated region
    $region2: #{tpu_custom_call.1} parent=1 // pred_check
      _
    $region3: #{tpu_custom_call.1} parent=1 // pred_check_branch
      %12 = sbr.rel (0) target = $region5
    $region4: #{tpu_custom_call.1} parent=1 // pred_region
      _
    $region5: #{tpu_custom_call.1} parent=1 // pred_fallthru
      _
    // Predicated region
    $region6: #{tpu_custom_call.1} parent=1 // pred_check
      _
    $region7: #{tpu_custom_call.1} parent=1 // pred_check_branch
      %14 = sbr.rel (0) target = $region9
    $region8: #{tpu_custom_call.1} parent=1 // pred_region
      _
    $region9: #{tpu_custom_call.1} parent=1 // pred_fallthru
      _
    // Predicated region
    $region10: #{tpu_custom_call.1} parent=1 // pred_check
      _
    $region11: #{tpu_custom_call.1} parent=1 // pred_check_branch
      %16 = sbr.rel (0) target = $region13
    $region12: #{tpu_custom_call.1} parent=1 // pred_region
      _
    $region13: #{tpu_custom_call.1} parent=1 // pred_fallthru
      _
    // Predicated region
    $region14: #{tpu_custom_call.1} parent=1 // pred_check
      _
    $region15: #{tpu_custom_call.1} parent=1 // pred_check_branch
      %18 = sbr.rel (0) target = $region17
    $region16: #{tpu_custom_call.1} parent=1 // pred_region
      _
    $region17: #{tpu_custom_call.1} parent=1 // pred_fallthru
      _
    // Predicated region
    $region18: #{tpu_custom_call.1} parent=1 // pred_check
      _
    $region19: #{tpu_custom_call.1} parent=1 // pred_check_branch
      %20 = sbr.rel (0) target = $region21
    $region20: #{tpu_custom_call.1} parent=1 // pred_region
      _
    $region21: #{tpu_custom_call.1} parent=1 // pred_fallthru
      _
    %v22 = vld [vmem:[%s0] sm:$0xff]
    %v23 = vpack.c.bf16 %v22, %v22
    %v24 = vld [vmem:[%s1] sm:$0x3]
    %v25 = vld [vmem:[%s2] sm:$0x1]
    %v27 = vlaneseq
    %v28 = vshrl.u32 %v27, 7
    %v29 = vsub.s32 0, %v28
    %v30 = vrot.slane %v25, %v29
    %vm32 = vcmask 31744
    %v34 = vsel %vm32, %v23, 0
    %vm36 = vcmask 1041408
    %v38 = vsel %vm36, %v24, 0
    %40 = vmatprep.subr.bf16.mxu0 0
    %41 = vmatpush1.bf16.msra.mxu0 0
    %42 = vmatprep.subr.bf16.mxu0 0
    %43 = vmatpush1.bf16.msra.mxu0 0
    %44 = vmatprep.subr.bf16.mxu0 0
    %45 = vmatpush1.bf16.msra.mxu0 0
    %46 = vmatprep.subr.bf16.mxu0 0
    %47 = vmatpush1.bf16.msra.mxu0 0
    %48 = vmatprep.subr.bf16.mxu0 0
    %49 = vmatpush1.bf16.msra.mxu0 0
    %50 = vmatprep.subr.bf16.mxu0 0
    %51 = vmatpush1.bf16.msra.mxu0 0
    %52 = vmatprep.subr.bf16.mxu0 0
    %53 = vmatpush1.bf16.msra.mxu0 0
    %54 = vmatprep.subr.bf16.mxu0 0
    %55 = vmatpush1.bf16.msra.mxu0 %v38
    %56 = vmatprep.subr.bf16.mxu0 0
    %57 = vmatpush2.bf16.msra.mxu0 0
    %58 = vmatprep.subr.bf16.mxu0 0
    %59 = vmatpush2.bf16.msra.mxu0 0
    %60 = vmatprep.subr.bf16.mxu0 0
    %61 = vmatpush2.bf16.msra.mxu0 0
    %62 = vmatprep.subr.bf16.mxu0 0
    %63 = vmatpush2.bf16.msra.mxu0 0
    %64 = vmatprep.subr.bf16.mxu0 0
    %65 = vmatpush2.bf16.msra.mxu0 0
    %66 = vmatprep.subr.bf16.mxu0 0
    %67 = vmatpush2.bf16.msra.mxu0 0
    %68 = vmatprep.subr.bf16.mxu0 0
    %69 = vmatpush2.bf16.msra.mxu0 0
    %70 = vmatprep.subr.bf16.mxu0 0
    %71 = vmatpush2.bf16.msra.mxu0 0
    %72 = vmatprep.mubr.bf16.mxu0 0
    %73 = vmatmul.mubr.bf16.gmra.mxu0 %v34
    %v74 = vpop.f32.mrf.mxu0
    %v75 = vadd.f32 %v30, %v74
    %v76 = vpop.f32.mrf.mxu0
    %v77 = vpop.f32.mrf.mxu0
    %v78 = vpop.f32.mrf.mxu0
    %79 = vdwg.mxu0
    %v80 = vpack.c.bf16 %v75, %v75
    %v81 = vtanh.bf16.pop %v80
    %v82 = vld [vmem:[%s3] sm:$0xf]
    %v83 = vld [vmem:[%s3 + $0x4] sm:$0xf]
    %v84 = vld [vmem:[%s3 + $0x8] sm:$0xf]
    %v85 = vld [vmem:[%s3 + $0xc] sm:$0xf]
    %v86 = vld [vmem:[%s3 + $0x10] sm:$0xf]
    %v87 = vld [vmem:[%s3 + $0x14] sm:$0xf]
    %v88 = vld [vmem:[%s3 + $0x18] sm:$0xf]
    %v89 = vld [vmem:[%s3 + $0x1c] sm:$0xf]
    %v90 = vld [vmem:[%s3 + $0x20] sm:$0xf]
    %v91 = vld [vmem:[%s3 + $0x24] sm:$0xf]
    %v92 = vld [vmem:[%s3 + $0x28] sm:$0xf]
    %v93 = vld [vmem:[%s3 + $0x2c] sm:$0xf]
    %v94 = vld [vmem:[%s3 + $0x30] sm:$0xf]
    %v95 = vld [vmem:[%s3 + $0x34] sm:$0xf]
    %v96 = vld [vmem:[%s3 + $0x38] sm:$0xf]
    %v97 = vld [vmem:[%s3 + $0x3c] sm:$0xf]
    %v98 = vld [vmem:[%s4] sm:$0x1]
    %v100 = vlaneseq
    %v101 = vshrl.u32 %v100, 7
    %v102 = vsub.s32 0, %v101
    %v103 = vrot.slane %v98, %v102
    %v121 = vunpack.c.l.b16 %v82
    %v122 = vunpack.c.l.b16 %v83
    %v123 = vunpack.c.l.b16 %v84
    %v124 = vunpack.c.l.b16 %v85
    %v125 = vunpack.c.l.b16 %v86
    %v126 = vunpack.c.l.b16 %v87
    %v127 = vunpack.c.l.b16 %v88
    %v128 = vunpack.c.l.b16 %v89
    %v129 = vunpack.c.l.b16 %v90
    %v130 = vunpack.c.l.b16 %v91
    %v131 = vunpack.c.l.b16 %v92
    %v132 = vunpack.c.l.b16 %v93
    %v133 = vunpack.c.l.b16 %v94
    %v134 = vunpack.c.l.b16 %v95
    %v135 = vunpack.c.l.b16 %v96
    %v136 = vunpack.c.l.b16 %v97
    %v137 = vpack.c.b16 %v122, %v121
    %v138 = vpack.c.b16 %v124, %v123
    %v139 = vpack.c.b16 %v126, %v125
    %v140 = vpack.c.b16 %v128, %v127
    %v141 = vpack.c.b16 %v130, %v129
    %v142 = vpack.c.b16 %v132, %v131
    %v143 = vpack.c.b16 %v134, %v133
    %v144 = vpack.c.b16 %v136, %v135
    %153 = vmatprep.subr.bf16.mxu0 0
    %154 = vmatpush1.bf16.msra.mxu0 %v144
    %155 = vmatprep.subr.bf16.mxu0 0
    %156 = vmatpush1.bf16.msra.mxu0 %v143
    %157 = vmatprep.subr.bf16.mxu0 0
    %158 = vmatpush1.bf16.msra.mxu0 %v142
    %159 = vmatprep.subr.bf16.mxu0 0
    %160 = vmatpush1.bf16.msra.mxu0 %v141
    %161 = vmatprep.subr.bf16.mxu0 0
    %162 = vmatpush1.bf16.msra.mxu0 %v140
    %163 = vmatprep.subr.bf16.mxu0 0
    %164 = vmatpush1.bf16.msra.mxu0 %v139
    %165 = vmatprep.subr.bf16.mxu0 0
    %166 = vmatpush1.bf16.msra.mxu0 %v138
    %167 = vmatprep.subr.bf16.mxu0 0
    %168 = vmatpush1.bf16.msra.mxu0 %v137
    %169 = vmatprep.subr.bf16.mxu0 0
    %170 = vmatpush2.bf16.msra.mxu0 0
    %171 = vmatprep.subr.bf16.mxu0 0
    %172 = vmatpush2.bf16.msra.mxu0 0
    %173 = vmatprep.subr.bf16.mxu0 0
    %174 = vmatpush2.bf16.msra.mxu0 0
    %175 = vmatprep.subr.bf16.mxu0 0
    %176 = vmatpush2.bf16.msra.mxu0 0
    %177 = vmatprep.subr.bf16.mxu0 0
    %178 = vmatpush2.bf16.msra.mxu0 0
    %179 = vmatprep.subr.bf16.mxu0 0
    %180 = vmatpush2.bf16.msra.mxu0 0
    %181 = vmatprep.subr.bf16.mxu0 0
    %182 = vmatpush2.bf16.msra.mxu0 0
    %183 = vmatprep.subr.bf16.mxu0 0
    %184 = vmatpush2.bf16.msra.mxu0 0
    %185 = vmatprep.mubr.bf16.mxu0 0
    %186 = vmatmul.mubr.bf16.gmra.mxu0 %v81
    %v187 = vpop.f32.mrf.mxu0
    %v188 = vadd.f32 %v103, %v187
    %v189 = vpop.f32.mrf.mxu0
    %v190 = vpop.f32.mrf.mxu0
    %v191 = vpop.f32.mrf.mxu0
    %192 = vdwg.mxu0
    %vm193 = vcmask 64512
    %194 = vst.msk [vmem:[#allocation2] sm:$0xff] %vm193, %v188
    // Predicated region
    $region22: #{tpu_custom_call.1} parent=1 // pred_check
      _
    $region23: #{tpu_custom_call.1} parent=1 // pred_check_branch
      %196 = sbr.rel (0) target = $region25
    $region24: #{tpu_custom_call.1} parent=1 // pred_region
      %s198 = ssub.s32 128, 32
      %199 = vsyncadd [#allocation3], %s198
      %s200 = sshll.u32 [#allocation2], 4
      %s201 = int_to_ptr.vmem [resolvable:$true] %s200
      %206 = dma.vmem_to_hbm [thread:$0]  %s201, 32, %s5, [#allocation3], 32, 32, 2
    $region25: #{tpu_custom_call.1} parent=1 // pred_fallthru
      _
    // Predicated region
    $region26: #{tpu_custom_call.1} parent=1 // pred_check
      _
    $region27: #{tpu_custom_call.1} parent=1 // pred_check_branch
      %208 = sbr.rel (0) target = $region29
    $region28: #{tpu_custom_call.1} parent=1 // pred_region
      %209 = dma.done [#allocation3], 128
    $region29: #{tpu_custom_call.1} parent=1 // pred_fallthru
      _
    %210 = vsyncpa [#allocation3], 1

</llo_original>
